<compile_context>
chip_gen: v7x
topology: tpu7x:2x2x1
jax: 0.10.0
libtpu: 0.0.40
codegen_flags: <defaults>
</compile_context>

<pallas_src>
import jax
import jax.numpy as jnp
from jax.experimental import pallas as pl
from jax.experimental.pallas import tpu as pltpu

# ------------------------- config (small, deterministic) -------------------------
BATCH = 2
SEQ = 8
HIDDEN = 32
NUM_HEADS = 4            # hidden_size must be divisible by num_heads
HEAD_DIM = HIDDEN // NUM_HEADS
EPS = 1e-5


def mha_kernel(x_ref, gamma_ref, beta_ref, wqkv_ref, wout_ref, o_ref):
    S, H, N, D = SEQ, HIDDEN, NUM_HEADS, HEAD_DIM

    x = x_ref[...]                                   # (S, H) f32 -- residual

    # ---- Pre-LN (f32, biased variance like torch.nn.LayerNorm) ----
    mean = jnp.mean(x, axis=-1, keepdims=True)
    var = jnp.mean((x - mean) ** 2, axis=-1, keepdims=True)
    h = (x - mean) * jax.lax.rsqrt(var + EPS)
    h = h * gamma_ref[...] + beta_ref[...]           # (S, H) f32

    # ---- fused QKV: single lane-dense matmul (bf16 MXU inputs, f32 accumulate).
    #      wqkv_ref: (H, 3H) bf16, Q columns pre-scaled by 1/sqrt(D). ----
    qkv = jnp.dot(h.astype(jnp.bfloat16), wqkv_ref[...],
                  preferred_element_type=jnp.float32)                 # (S, 3H)

    # ---- per-head attention (static unroll; slices are static lane slices of
    #      the (S, 3H) result, column order matches torch's view(B,S,3,N,D)) ----
    ctx_heads = []
    for n in range(N):
        q_n = qkv[:, n * D:(n + 1) * D].astype(jnp.bfloat16)                  # (S, D)
        k_n = qkv[:, H + n * D:H + (n + 1) * D].astype(jnp.bfloat16)          # (S, D)
        v_n = qkv[:, 2 * H + n * D:2 * H + (n + 1) * D].astype(jnp.bfloat16)  # (S, D)

        s = jnp.einsum('qd,kd->qk', q_n, k_n,
                       preferred_element_type=jnp.float32)            # (S, S) f32
        # softmax in f32; denominator reciprocal on the EUP
        s = s - jnp.max(s, axis=-1, keepdims=True)
        p = jnp.exp(s)
        p = p * pl.reciprocal(jnp.sum(p, axis=-1, keepdims=True), approx=True)

        ctx_heads.append(jnp.dot(p.astype(jnp.bfloat16), v_n,
                                 preferred_element_type=jnp.float32))  # (S, D)

    # Minor-dim concat of heads (== torch transpose(1,2).reshape(B,S,H) layout),
    # then a single output-projection matmul + residual (eval: dropout = id).
    ctx = jnp.concatenate(ctx_heads, axis=-1).astype(jnp.bfloat16)     # (S, H)
    out = jnp.dot(ctx, wout_ref[...], preferred_element_type=jnp.float32) + x
    o_ref[...] = out


def prepare_weights(wqkv_t, wout_t):
    """One-time host-side constant fold of the nn.Linear weights.

    wqkv_t: (H, 3H) = W_qkv^T (y = x @ W^T);  wout_t: (H, H) = W_out^T.
    Folds 1/sqrt(head_dim) into the Q columns (first H output columns) and casts
    both weights to bf16.  No head-major reorg: layouts stay lane-dense.
    """
    scale = 1.0 / (HEAD_DIM ** 0.5)
    wqkv_fold = jnp.concatenate(
        [wqkv_t[:, :HIDDEN] * scale, wqkv_t[:, HIDDEN:]], axis=-1)
    return wqkv_fold.astype(jnp.bfloat16), wout_t.astype(jnp.bfloat16)


def enhanced_mha_forward(x, gamma, beta, wqkv_bf16, wout_bf16):
    """x: (B, S, H) f32; gamma/beta: (1, H) f32; wqkv: (H, 3H) bf16; wout: (H, H) bf16."""
    B, S, H = x.shape
    BS = B * S
    out = pl.pallas_call(
        mha_kernel,
        out_shape=jax.ShapeDtypeStruct((BS, H), jnp.float32),
        grid=(B,),                                   # per-batch step; parallel on v7x megacore
        in_specs=[
            pl.BlockSpec((S, H), lambda b: (b, 0)),              # x rows of this batch
            pl.BlockSpec((1, H), lambda b: (0, 0)),              # gamma (VMEM-resident)
            pl.BlockSpec((1, H), lambda b: (0, 0)),              # beta
            pl.BlockSpec((H, 3 * H), lambda b: (0, 0)),          # W_qkv (H, 3H) bf16
            pl.BlockSpec((H, H), lambda b: (0, 0)),              # W_out (H, H) bf16
        ],
        out_specs=pl.BlockSpec((S, H), lambda b: (b, 0)),
        compiler_params=pltpu.CompilerParams(
            dimension_semantics=("parallel",),
        ),
    )(x.reshape(BS, H), gamma, beta, wqkv_bf16, wout_bf16)
    return out.reshape(B, S, H)


def reference_forward(x, gamma, beta, wqkv_t, wout_t):
    """Pure-JAX reference mirroring the PyTorch forward (eval mode, default config)."""
    B, S, H = x.shape
    mean = jnp.mean(x, axis=-1, keepdims=True)
    var = jnp.mean((x - mean) ** 2, axis=-1, keepdims=True)
    h = (x - mean) / jnp.sqrt(var + EPS) * gamma[0] + beta[0]
    qkv = h @ wqkv_t                                             # (B, S, 3H)
    qkv = qkv.reshape(B, S, 3, NUM_HEADS, HEAD_DIM)
    q = jnp.transpose(qkv[:, :, 0], (0, 2, 1, 3))                # (B, N, S, D)
    k = jnp.transpose(qkv[:, :, 1], (0, 2, 1, 3))
    v = jnp.transpose(qkv[:, :, 2], (0, 2, 1, 3))
    scores = jnp.einsum("bnsd,bntd->bnst", q, k) / (HEAD_DIM ** 0.5)
    p = jax.nn.softmax(scores, axis=-1)
    ctx = jnp.einsum("bnst,bntd->bnsd", p, v)
    ctx = jnp.transpose(ctx, (0, 2, 1, 3)).reshape(B, S, H)
    return ctx @ wout_t + x


if __name__ == "__main__":
    key = jax.random.PRNGKey(0)
    kx, kg, kb, kqkv, kout = jax.random.split(key, 5)

    x = jax.random.normal(kx, (BATCH, SEQ, HIDDEN), dtype=jnp.float32)
    # LayerNorm params (deterministic, slightly perturbed from defaults)
    gamma = (1.0 + 0.1 * jax.random.normal(kg, (1, HIDDEN))).astype(jnp.float32)
    beta = (0.1 * jax.random.normal(kb, (1, HIDDEN))).astype(jnp.float32)
    # Linear weights (no bias), stored pre-transposed: y = x @ W^T.
    wqkv_t = (0.05 * jax.random.normal(kqkv, (HIDDEN, 3 * HIDDEN))).astype(jnp.float32)
    wout_t = (0.05 * jax.random.normal(kout, (HIDDEN, HIDDEN))).astype(jnp.float32)

    # One-time constant fold: attention-scale fold into Q columns + bf16 cast.
    wqkv_bf16, wout_bf16 = prepare_weights(wqkv_t, wout_t)

    out = enhanced_mha_forward(x, gamma, beta, wqkv_bf16, wout_bf16)
    out = jax.block_until_ready(out)

    ref = reference_forward(x, gamma, beta, wqkv_t, wout_t)
    assert out.shape == (BATCH, SEQ, HIDDEN)
    assert jnp.allclose(out, ref, rtol=2e-2, atol=2e-2), "mismatch vs reference"

    print("KERNEL_OK")
</pallas_src>

<mosaic_0001>
module attributes {stable_mosaic.version = 11 : i64} {
  func.func @mha_kernel(%arg0: i32, %arg1: memref<8x32xf32, #tpu.memory_space<vmem>>, %arg2: memref<1x32xf32, #tpu.memory_space<vmem>>, %arg3: memref<1x32xf32, #tpu.memory_space<vmem>>, %arg4: memref<32x96xbf16, #tpu.memory_space<vmem>>, %arg5: memref<32x32xbf16, #tpu.memory_space<vmem>>, %arg6: memref<8x32xf32, #tpu.memory_space<vmem>>) attributes {dimension_semantics = [#tpu.dimension_semantics<parallel>], iteration_bounds = array<i64: 2>, scalar_prefetch = 0 : i64, scratch_operands = 0 : i64, tpu.core_type = #tpu.core_type<tc>, window_params = [{transform_indices = @transform_0, window_bounds = array<i64: 8, 32>}, {pipeline_mode = #tpu.pipeline_mode<synchronous>, transform_indices = @transform_1, window_bounds = array<i64: 1, 32>}, {pipeline_mode = #tpu.pipeline_mode<synchronous>, transform_indices = @transform_2, window_bounds = array<i64: 1, 32>}, {pipeline_mode = #tpu.pipeline_mode<synchronous>, transform_indices = @transform_3, window_bounds = array<i64: 32, 96>}, {pipeline_mode = #tpu.pipeline_mode<synchronous>, transform_indices = @transform_4, window_bounds = array<i64: 32, 32>}, {transform_indices = @transform_5, window_bounds = array<i64: 8, 32>}]} {
    %c0 = arith.constant 0 : index
    %c0_0 = arith.constant 0 : index
    %0 = vector.load %arg1[%c0, %c0_0] : memref<8x32xf32, #tpu.memory_space<vmem>>, vector<8x32xf32>
    %cst = arith.constant dense<0.000000e+00> : vector<8xf32>
    %1 = vector.multi_reduction <add>, %0, %cst [1] : vector<8x32xf32> to vector<8xf32>
    %2 = vector.shape_cast %1 : vector<8xf32> to vector<8x1xf32>
    %cst_1 = arith.constant 3.200000e+01 : f32
    %3 = vector.broadcast %cst_1 : f32 to vector<8x1xf32>
    %4 = arith.divf %2, %3 : vector<8x1xf32>
    %5 = vector.broadcast %4 : vector<8x1xf32> to vector<8x32xf32>
    %6 = arith.subf %0, %5 : vector<8x32xf32>
    %7 = arith.mulf %6, %6 : vector<8x32xf32>
    %cst_2 = arith.constant dense<0.000000e+00> : vector<8xf32>
    %8 = vector.multi_reduction <add>, %7, %cst_2 [1] : vector<8x32xf32> to vector<8xf32>
    %9 = vector.shape_cast %8 : vector<8xf32> to vector<8x1xf32>
    %cst_3 = arith.constant 3.200000e+01 : f32
    %10 = vector.broadcast %cst_3 : f32 to vector<8x1xf32>
    %11 = arith.divf %9, %10 : vector<8x1xf32>
    %12 = vector.broadcast %4 : vector<8x1xf32> to vector<8x32xf32>
    %13 = arith.subf %0, %12 : vector<8x32xf32>
    %cst_4 = arith.constant 9.99999974E-6 : f32
    %14 = vector.broadcast %cst_4 : f32 to vector<8x1xf32>
    %15 = arith.addf %11, %14 : vector<8x1xf32>
    %16 = math.rsqrt %15 : vector<8x1xf32>
    %17 = vector.broadcast %16 : vector<8x1xf32> to vector<8x32xf32>
    %18 = arith.mulf %13, %17 : vector<8x32xf32>
    %c0_5 = arith.constant 0 : index
    %c0_6 = arith.constant 0 : index
    %19 = vector.load %arg2[%c0_5, %c0_6] : memref<1x32xf32, #tpu.memory_space<vmem>>, vector<1x32xf32>
    %20 = vector.broadcast %19 : vector<1x32xf32> to vector<8x32xf32>
    %21 = arith.mulf %18, %20 : vector<8x32xf32>
    %c0_7 = arith.constant 0 : index
    %c0_8 = arith.constant 0 : index
    %22 = vector.load %arg3[%c0_7, %c0_8] : memref<1x32xf32, #tpu.memory_space<vmem>>, vector<1x32xf32>
    %23 = vector.broadcast %22 : vector<1x32xf32> to vector<8x32xf32>
    %24 = arith.addf %21, %23 : vector<8x32xf32>
    %25 = arith.truncf %24 : vector<8x32xf32> to vector<8x32xbf16>
    %c0_9 = arith.constant 0 : index
    %c0_10 = arith.constant 0 : index
    %26 = vector.load %arg4[%c0_9, %c0_10] : memref<32x96xbf16, #tpu.memory_space<vmem>>, vector<32x96xbf16>
    %cst_11 = arith.constant dense<0.000000e+00> : vector<8x96xf32>
    %27 = tpu.matmul %25, %26, %cst_11 {dimension_numbers = #tpu.dot_dimension_numbers<[1], [0], [0], [1], [0, 0, 1, 1], [], []>} : vector<8x32xbf16>, vector<32x96xbf16>, vector<8x96xf32> -> vector<8x96xf32>
    %28 = vector.extract_strided_slice %27 {offsets = [0, 0], sizes = [8, 8], strides = [1, 1]} : vector<8x96xf32> to vector<8x8xf32>
    %29 = arith.truncf %28 : vector<8x8xf32> to vector<8x8xbf16>
    %30 = vector.extract_strided_slice %27 {offsets = [0, 32], sizes = [8, 8], strides = [1, 1]} : vector<8x96xf32> to vector<8x8xf32>
    %31 = arith.truncf %30 : vector<8x8xf32> to vector<8x8xbf16>
    %32 = vector.extract_strided_slice %27 {offsets = [0, 64], sizes = [8, 8], strides = [1, 1]} : vector<8x96xf32> to vector<8x8xf32>
    %33 = arith.truncf %32 : vector<8x8xf32> to vector<8x8xbf16>
    "tpu.trace_start"() <{level = 10 : i32, message = "qd,kd->qk"}> : () -> ()
    %cst_12 = arith.constant dense<0.000000e+00> : vector<8x8xf32>
    %34 = tpu.matmul %29, %31, %cst_12 {dimension_numbers = #tpu.dot_dimension_numbers<[1], [1], [0], [0], [0, 0, 1, 0], [], []>} : vector<8x8xbf16>, vector<8x8xbf16>, vector<8x8xf32> -> vector<8x8xf32>
    "tpu.trace_stop"() : () -> ()
    %cst_13 = arith.constant dense<0xFF800000> : vector<8xf32>
    %35 = vector.multi_reduction <maximumf>, %34, %cst_13 [1] : vector<8x8xf32> to vector<8xf32>
    %36 = vector.shape_cast %35 : vector<8xf32> to vector<8x1xf32>
    %37 = vector.broadcast %36 : vector<8x1xf32> to vector<8x8xf32>
    %38 = arith.subf %34, %37 : vector<8x8xf32>
    %39 = math.exp %38 : vector<8x8xf32>
    %cst_14 = arith.constant dense<0.000000e+00> : vector<8xf32>
    %40 = vector.multi_reduction <add>, %39, %cst_14 [1] : vector<8x8xf32> to vector<8xf32>
    %41 = vector.shape_cast %40 : vector<8xf32> to vector<8x1xf32>
    %42 = tpu.reciprocal %41 {approx = true} : vector<8x1xf32> -> vector<8x1xf32>
    %43 = vector.broadcast %42 : vector<8x1xf32> to vector<8x8xf32>
    %44 = arith.mulf %39, %43 : vector<8x8xf32>
    %45 = arith.truncf %44 : vector<8x8xf32> to vector<8x8xbf16>
    %cst_15 = arith.constant dense<0.000000e+00> : vector<8x8xf32>
    %46 = tpu.matmul %45, %33, %cst_15 {dimension_numbers = #tpu.dot_dimension_numbers<[1], [0], [0], [1], [0, 0, 1, 1], [], []>} : vector<8x8xbf16>, vector<8x8xbf16>, vector<8x8xf32> -> vector<8x8xf32>
    %47 = vector.extract_strided_slice %27 {offsets = [0, 8], sizes = [8, 8], strides = [1, 1]} : vector<8x96xf32> to vector<8x8xf32>
    %48 = arith.truncf %47 : vector<8x8xf32> to vector<8x8xbf16>
    %49 = vector.extract_strided_slice %27 {offsets = [0, 40], sizes = [8, 8], strides = [1, 1]} : vector<8x96xf32> to vector<8x8xf32>
    %50 = arith.truncf %49 : vector<8x8xf32> to vector<8x8xbf16>
    %51 = vector.extract_strided_slice %27 {offsets = [0, 72], sizes = [8, 8], strides = [1, 1]} : vector<8x96xf32> to vector<8x8xf32>
    %52 = arith.truncf %51 : vector<8x8xf32> to vector<8x8xbf16>
    "tpu.trace_start"() <{level = 10 : i32, message = "qd,kd->qk"}> : () -> ()
    %cst_16 = arith.constant dense<0.000000e+00> : vector<8x8xf32>
    %53 = tpu.matmul %48, %50, %cst_16 {dimension_numbers = #tpu.dot_dimension_numbers<[1], [1], [0], [0], [0, 0, 1, 0], [], []>} : vector<8x8xbf16>, vector<8x8xbf16>, vector<8x8xf32> -> vector<8x8xf32>
    "tpu.trace_stop"() : () -> ()
    %cst_17 = arith.constant dense<0xFF800000> : vector<8xf32>
    %54 = vector.multi_reduction <maximumf>, %53, %cst_17 [1] : vector<8x8xf32> to vector<8xf32>
    %55 = vector.shape_cast %54 : vector<8xf32> to vector<8x1xf32>
    %56 = vector.broadcast %55 : vector<8x1xf32> to vector<8x8xf32>
    %57 = arith.subf %53, %56 : vector<8x8xf32>
    %58 = math.exp %57 : vector<8x8xf32>
    %cst_18 = arith.constant dense<0.000000e+00> : vector<8xf32>
    %59 = vector.multi_reduction <add>, %58, %cst_18 [1] : vector<8x8xf32> to vector<8xf32>
    %60 = vector.shape_cast %59 : vector<8xf32> to vector<8x1xf32>
    %61 = tpu.reciprocal %60 {approx = true} : vector<8x1xf32> -> vector<8x1xf32>
    %62 = vector.broadcast %61 : vector<8x1xf32> to vector<8x8xf32>
    %63 = arith.mulf %58, %62 : vector<8x8xf32>
    %64 = arith.truncf %63 : vector<8x8xf32> to vector<8x8xbf16>
    %cst_19 = arith.constant dense<0.000000e+00> : vector<8x8xf32>
    %65 = tpu.matmul %64, %52, %cst_19 {dimension_numbers = #tpu.dot_dimension_numbers<[1], [0], [0], [1], [0, 0, 1, 1], [], []>} : vector<8x8xbf16>, vector<8x8xbf16>, vector<8x8xf32> -> vector<8x8xf32>
    %66 = vector.extract_strided_slice %27 {offsets = [0, 16], sizes = [8, 8], strides = [1, 1]} : vector<8x96xf32> to vector<8x8xf32>
    %67 = arith.truncf %66 : vector<8x8xf32> to vector<8x8xbf16>
    %68 = vector.extract_strided_slice %27 {offsets = [0, 48], sizes = [8, 8], strides = [1, 1]} : vector<8x96xf32> to vector<8x8xf32>
    %69 = arith.truncf %68 : vector<8x8xf32> to vector<8x8xbf16>
    %70 = vector.extract_strided_slice %27 {offsets = [0, 80], sizes = [8, 8], strides = [1, 1]} : vector<8x96xf32> to vector<8x8xf32>
    %71 = arith.truncf %70 : vector<8x8xf32> to vector<8x8xbf16>
    "tpu.trace_start"() <{level = 10 : i32, message = "qd,kd->qk"}> : () -> ()
    %cst_20 = arith.constant dense<0.000000e+00> : vector<8x8xf32>
    %72 = tpu.matmul %67, %69, %cst_20 {dimension_numbers = #tpu.dot_dimension_numbers<[1], [1], [0], [0], [0, 0, 1, 0], [], []>} : vector<8x8xbf16>, vector<8x8xbf16>, vector<8x8xf32> -> vector<8x8xf32>
    "tpu.trace_stop"() : () -> ()
    %cst_21 = arith.constant dense<0xFF800000> : vector<8xf32>
    %73 = vector.multi_reduction <maximumf>, %72, %cst_21 [1] : vector<8x8xf32> to vector<8xf32>
    %74 = vector.shape_cast %73 : vector<8xf32> to vector<8x1xf32>
    %75 = vector.broadcast %74 : vector<8x1xf32> to vector<8x8xf32>
    %76 = arith.subf %72, %75 : vector<8x8xf32>
    %77 = math.exp %76 : vector<8x8xf32>
    %cst_22 = arith.constant dense<0.000000e+00> : vector<8xf32>
    %78 = vector.multi_reduction <add>, %77, %cst_22 [1] : vector<8x8xf32> to vector<8xf32>
    %79 = vector.shape_cast %78 : vector<8xf32> to vector<8x1xf32>
    %80 = tpu.reciprocal %79 {approx = true} : vector<8x1xf32> -> vector<8x1xf32>
    %81 = vector.broadcast %80 : vector<8x1xf32> to vector<8x8xf32>
    %82 = arith.mulf %77, %81 : vector<8x8xf32>
    %83 = arith.truncf %82 : vector<8x8xf32> to vector<8x8xbf16>
    %cst_23 = arith.constant dense<0.000000e+00> : vector<8x8xf32>
    %84 = tpu.matmul %83, %71, %cst_23 {dimension_numbers = #tpu.dot_dimension_numbers<[1], [0], [0], [1], [0, 0, 1, 1], [], []>} : vector<8x8xbf16>, vector<8x8xbf16>, vector<8x8xf32> -> vector<8x8xf32>
    %85 = vector.extract_strided_slice %27 {offsets = [0, 24], sizes = [8, 8], strides = [1, 1]} : vector<8x96xf32> to vector<8x8xf32>
    %86 = arith.truncf %85 : vector<8x8xf32> to vector<8x8xbf16>
    %87 = vector.extract_strided_slice %27 {offsets = [0, 56], sizes = [8, 8], strides = [1, 1]} : vector<8x96xf32> to vector<8x8xf32>
    %88 = arith.truncf %87 : vector<8x8xf32> to vector<8x8xbf16>
    %89 = vector.extract_strided_slice %27 {offsets = [0, 88], sizes = [8, 8], strides = [1, 1]} : vector<8x96xf32> to vector<8x8xf32>
    %90 = arith.truncf %89 : vector<8x8xf32> to vector<8x8xbf16>
    "tpu.trace_start"() <{level = 10 : i32, message = "qd,kd->qk"}> : () -> ()
    %cst_24 = arith.constant dense<0.000000e+00> : vector<8x8xf32>
    %91 = tpu.matmul %86, %88, %cst_24 {dimension_numbers = #tpu.dot_dimension_numbers<[1], [1], [0], [0], [0, 0, 1, 0], [], []>} : vector<8x8xbf16>, vector<8x8xbf16>, vector<8x8xf32> -> vector<8x8xf32>
    "tpu.trace_stop"() : () -> ()
    %cst_25 = arith.constant dense<0xFF800000> : vector<8xf32>
    %92 = vector.multi_reduction <maximumf>, %91, %cst_25 [1] : vector<8x8xf32> to vector<8xf32>
    %93 = vector.shape_cast %92 : vector<8xf32> to vector<8x1xf32>
    %94 = vector.broadcast %93 : vector<8x1xf32> to vector<8x8xf32>
    %95 = arith.subf %91, %94 : vector<8x8xf32>
    %96 = math.exp %95 : vector<8x8xf32>
    %cst_26 = arith.constant dense<0.000000e+00> : vector<8xf32>
    %97 = vector.multi_reduction <add>, %96, %cst_26 [1] : vector<8x8xf32> to vector<8xf32>
    %98 = vector.shape_cast %97 : vector<8xf32> to vector<8x1xf32>
    %99 = tpu.reciprocal %98 {approx = true} : vector<8x1xf32> -> vector<8x1xf32>
    %100 = vector.broadcast %99 : vector<8x1xf32> to vector<8x8xf32>
    %101 = arith.mulf %96, %100 : vector<8x8xf32>
    %102 = arith.truncf %101 : vector<8x8xf32> to vector<8x8xbf16>
    %cst_27 = arith.constant dense<0.000000e+00> : vector<8x8xf32>
    %103 = tpu.matmul %102, %90, %cst_27 {dimension_numbers = #tpu.dot_dimension_numbers<[1], [0], [0], [1], [0, 0, 1, 1], [], []>} : vector<8x8xbf16>, vector<8x8xbf16>, vector<8x8xf32> -> vector<8x8xf32>
    %104 = tpu.concatenate %46, %65, %84, %103 in 1 : vector<8x8xf32>, vector<8x8xf32>, vector<8x8xf32>, vector<8x8xf32> -> vector<8x32xf32>
    %105 = arith.truncf %104 : vector<8x32xf32> to vector<8x32xbf16>
    %c0_28 = arith.constant 0 : index
    %c0_29 = arith.constant 0 : index
    %106 = vector.load %arg5[%c0_28, %c0_29] : memref<32x32xbf16, #tpu.memory_space<vmem>>, vector<32x32xbf16>
    %cst_30 = arith.constant dense<0.000000e+00> : vector<8x32xf32>
    %107 = tpu.matmul %105, %106, %cst_30 {dimension_numbers = #tpu.dot_dimension_numbers<[1], [0], [0], [1], [0, 0, 1, 1], [], []>} : vector<8x32xbf16>, vector<32x32xbf16>, vector<8x32xf32> -> vector<8x32xf32>
    %108 = arith.addf %107, %0 : vector<8x32xf32>
    %c0_31 = arith.constant 0 : index
    %c0_32 = arith.constant 0 : index
    %109 = vector.load %arg6[%c0_31, %c0_32] : memref<8x32xf32, #tpu.memory_space<vmem>>, vector<8x32xf32>
    tpu.vector_store %arg6[%c0_31, %c0_32], %108 {strides = array<i32>} : memref<8x32xf32, #tpu.memory_space<vmem>>, vector<8x32xf32>,
    return
  }
  func.func @transform_0(%arg0: i32) -> (i32, i32) {
    %c0_i32 = arith.constant 0 : i32
    %c0_i32_0 = arith.constant 0 : i32
    return %arg0, %c0_i32 : i32, i32
  }
  func.func @transform_1(%arg0: i32) -> (i32, i32) {
    %c0_i32 = arith.constant 0 : i32
    %c0_i32_0 = arith.constant 0 : i32
    %c0_i32_1 = arith.constant 0 : i32
    return %c0_i32, %c0_i32_0 : i32, i32
  }
  func.func @transform_2(%arg0: i32) -> (i32, i32) {
    %c0_i32 = arith.constant 0 : i32
    %c0_i32_0 = arith.constant 0 : i32
    %c0_i32_1 = arith.constant 0 : i32
    return %c0_i32, %c0_i32_0 : i32, i32
  }
  func.func @transform_3(%arg0: i32) -> (i32, i32) {
    %c0_i32 = arith.constant 0 : i32
    %c0_i32_0 = arith.constant 0 : i32
    %c0_i32_1 = arith.constant 0 : i32
    return %c0_i32, %c0_i32_0 : i32, i32
  }
  func.func @transform_4(%arg0: i32) -> (i32, i32) {
    %c0_i32 = arith.constant 0 : i32
    %c0_i32_0 = arith.constant 0 : i32
    %c0_i32_1 = arith.constant 0 : i32
    return %c0_i32, %c0_i32_0 : i32, i32
  }
  func.func @transform_5(%arg0: i32) -> (i32, i32) {
    %c0_i32 = arith.constant 0 : i32
    %c0_i32_0 = arith.constant 0 : i32
    return %arg0, %c0_i32 : i32, i32
  }
}

</mosaic_0001>

<llo_original>
// kernel: tpu_custom_call.1
$region0: #{tpu_custom_call.1}
  #allocation0 [shape = 'u32[]', space=smem, size = 0x4, offset = 0x4, fixed_abs, tag = 'smem constant byte address 0x4 - core index']
  #allocation1 [shape = 'u32[144,128]{1,0:T(1,128)}', space=vmem, size = 0x12000, scoped, tag = 'internal scratch']
  %s0 = inlined_call_operand.hbm [shape: f32[16,32], index: 0, kind: input, shape index: {}]
  %s1 = inlined_call_operand.vmem [shape: f32[1,32], index: 1, kind: input, shape index: {}]
  %s2 = inlined_call_operand.vmem [shape: f32[1,32], index: 2, kind: input, shape index: {}]
  %s3 = inlined_call_operand.hbm [shape: bf16[32,96], index: 3, kind: input, shape index: {}]
  %s4 = inlined_call_operand.hbm [shape: bf16[32,32], index: 4, kind: input, shape index: {}]
  %s5 = inlined_call_operand.hbm [shape: f32[16,32], index: 5, kind: output, shape index: {}]
  %s6 = sld [smem:[#allocation0]]
  $region65: #{tpu_custom_call.1} parent=0
    _
  %s8 = ssub.s32 1, %s6
  %s9 = scalar_select 0, %s8, %s6
  $region1: #{tpu_custom_call.1} parent=0
    #allocation2 [shape = 'u8[8192]{0}', space=vmem, size = 0x2000, scoped, tag = 'input window, operand 0']
    #allocation3 [shape = 's32[2]{0}', space=sflag, size = 0x8, scoped, tag = 'scoped memory for tpu_custom_call.1']
    #allocation4 [shape = 's32[2]{0}', space=sflag, size = 0x8, scoped, tag = 'scoped memory for tpu_custom_call.1']
    #allocation5 [shape = 'u8[8192]{0}', space=vmem, size = 0x2000, scoped, tag = 'input window, operand 3, single buffered']
    #allocation6 [shape = 's32[1]{0}', space=sflag, size = 0x4, scoped, tag = 'scoped memory for tpu_custom_call.1']
    #allocation7 [shape = 'u8[8192]{0}', space=vmem, size = 0x2000, scoped, tag = 'input window, operand 4, single buffered']
    #allocation8 [shape = 'u8[8192]{0}', space=vmem, size = 0x2000, scoped, tag = 'output window, operand 0']
    %10 = vsyncpa [#allocation3], 0
    %s11 = scalar_lea.sflag [#allocation3], 1
    %12 = vsyncpa %s11, 0
    %13 = vsyncpa [#allocation6], 0
    %14 = vsyncpa [#allocation4], 0
    %s15 = scalar_lea.sflag [#allocation4], 1
    %16 = vsyncpa %s15, 0
    loop: start=0, step=1, limit=4
    $region2: #{tpu_custom_call.1} parent=1 // loop_pre_header
      _
    $region3: #{tpu_custom_call.1} parent=1 // loop_header
      %s18 = sphi 0, %s22
      %p19 = scmp.ge.s32.totalorder %s18, 4
      %s28 = sphi 0, %s30
      %s31 = sphi 0, %s28
      %s32 = sphi 0, %s31
      %s48 = sphi 0, %s32
      %s52 = sphi 0, %s52
      %s54 = sphi 0, %s52
      %s55 = sphi 0, %s54
      %s69 = sphi 0, %s55
      %s73 = sphi 0, %s73
      %s75 = sphi 0, %s73
      %s76 = sphi 0, %s75
      %s90 = sphi 0, %s76
      %s94 = sphi 0, %s94
      %s96 = sphi 0, %s94
      %s97 = sphi 0, %s96
      %s111 = sphi 0, %s97
      %s115 = sphi 0, %s115
      %s117 = sphi 0, %s115
      %s118 = sphi 0, %s117
      %s132 = sphi 0, %s118
      %s138 = sphi 0, %s140
      %s141 = sphi 0, %s138
      %s142 = sphi 0, %s141
      %s158 = sphi 0, %s142
    $region4: #{tpu_custom_call.1} parent=1 // loop_header_branch
      %21 = sbr.rel (%p19) target = $region8
    $region5: #{tpu_custom_call.1} parent=1 // loop_body
      %s23 = ssub.s32 %s18, 1
      %s24 = ssub.s32 %s18, 2
      %s25 = sadd.s32 %s18, 1
      %s26 = ssub.s32 %s18, %s25
      %p27 = scmp.eq.s32.totalorder %s26, 0
      %s29 = sadd.s32 %s28, 1
      %s30 = scalar_select %p27, %s28, %s29
      %p33 = pneg %p27
      %p34 = scmp.eq.s32.totalorder %s18, 1
      %p35 = por %p33, %p34
      %p36 = scmp.ne.s32.totalorder %s28, %s31
      %p37 = scmp.eq.s32.totalorder %s18, 0
      %p38 = por %p36, %p37
      %p39 = scmp.ne.s32.totalorder %s28, %s31
      %p40 = scmp.eq.s32.totalorder %s23, 1
      %p41 = por %p39, %p40
      %p42 = scmp.ne.s32.totalorder %s31, %s32
      %p43 = scmp.eq.s32.totalorder %s23, 0
      %p44 = por %p42, %p43
      %p45 = scmp.ne.s32.totalorder %s31, %s32
      %p46 = scmp.eq.s32.totalorder %s24, 1
      %p47 = por %p45, %p46
      %p49 = scmp.ne.s32.totalorder %s32, %s48
      %p50 = scmp.eq.s32.totalorder %s24, 0
      %p51 = por %p49, %p50
      %s53 = sadd.s32 %s52, 1
      %p56 = scmp.eq.s32.totalorder %s18, 1
      %p57 = scmp.ne.s32.totalorder %s52, %s54
      %p58 = scmp.eq.s32.totalorder %s18, 0
      %p59 = por %p57, %p58
      %p60 = scmp.ne.s32.totalorder %s52, %s54
      %p61 = scmp.eq.s32.totalorder %s23, 1
      %p62 = por %p60, %p61
      %p63 = scmp.ne.s32.totalorder %s54, %s55
      %p64 = scmp.eq.s32.totalorder %s23, 0
      %p65 = por %p63, %p64
      %p66 = scmp.ne.s32.totalorder %s54, %s55
      %p67 = scmp.eq.s32.totalorder %s24, 1
      %p68 = por %p66, %p67
      %p70 = scmp.ne.s32.totalorder %s55, %s69
      %p71 = scmp.eq.s32.totalorder %s24, 0
      %p72 = por %p70, %p71
      %s74 = sadd.s32 %s73, 1
      %p77 = scmp.eq.s32.totalorder %s18, 1
      %p78 = scmp.ne.s32.totalorder %s73, %s75
      %p79 = scmp.eq.s32.totalorder %s18, 0
      %p80 = por %p78, %p79
      %p81 = scmp.ne.s32.totalorder %s73, %s75
      %p82 = scmp.eq.s32.totalorder %s23, 1
      %p83 = por %p81, %p82
      %p84 = scmp.ne.s32.totalorder %s75, %s76
      %p85 = scmp.eq.s32.totalorder %s23, 0
      %p86 = por %p84, %p85
      %p87 = scmp.ne.s32.totalorder %s75, %s76
      %p88 = scmp.eq.s32.totalorder %s24, 1
      %p89 = por %p87, %p88
      %p91 = scmp.ne.s32.totalorder %s76, %s90
      %p92 = scmp.eq.s32.totalorder %s24, 0
      %p93 = por %p91, %p92
      %s95 = sadd.s32 %s94, 1
      %p98 = scmp.eq.s32.totalorder %s18, 1
      %p99 = scmp.ne.s32.totalorder %s94, %s96
      %p100 = scmp.eq.s32.totalorder %s18, 0
      %p101 = por %p99, %p100
      %p102 = scmp.ne.s32.totalorder %s94, %s96
      %p103 = scmp.eq.s32.totalorder %s23, 1
      %p104 = por %p102, %p103
      %p105 = scmp.ne.s32.totalorder %s96, %s97
      %p106 = scmp.eq.s32.totalorder %s23, 0
      %p107 = por %p105, %p106
      %p108 = scmp.ne.s32.totalorder %s96, %s97
      %p109 = scmp.eq.s32.totalorder %s24, 1
      %p110 = por %p108, %p109
      %p112 = scmp.ne.s32.totalorder %s97, %s111
      %p113 = scmp.eq.s32.totalorder %s24, 0
      %p114 = por %p112, %p113
      %s116 = sadd.s32 %s115, 1
      %p119 = scmp.eq.s32.totalorder %s18, 1
      %p120 = scmp.ne.s32.totalorder %s115, %s117
      %p121 = scmp.eq.s32.totalorder %s18, 0
      %p122 = por %p120, %p121
      %p123 = scmp.ne.s32.totalorder %s115, %s117
      %p124 = scmp.eq.s32.totalorder %s23, 1
      %p125 = por %p123, %p124
      %p126 = scmp.ne.s32.totalorder %s117, %s118
      %p127 = scmp.eq.s32.totalorder %s23, 0
      %p128 = por %p126, %p127
      %p129 = scmp.ne.s32.totalorder %s117, %s118
      %p130 = scmp.eq.s32.totalorder %s24, 1
      %p131 = por %p129, %p130
      %p133 = scmp.ne.s32.totalorder %s118, %s132
      %p134 = scmp.eq.s32.totalorder %s24, 0
      %p135 = por %p133, %p134
      %s136 = ssub.s32 %s18, %s25
      %p137 = scmp.eq.s32.totalorder %s136, 0
      %s139 = sadd.s32 %s138, 1
      %s140 = scalar_select %p137, %s138, %s139
      %p143 = pneg %p137
      %p144 = scmp.eq.s32.totalorder %s18, 1
      %p145 = por %p143, %p144
      %p146 = scmp.ne.s32.totalorder %s138, %s141
      %p147 = scmp.eq.s32.totalorder %s18, 0
      %p148 = por %p146, %p147
      %p149 = scmp.ne.s32.totalorder %s138, %s141
      %p150 = scmp.eq.s32.totalorder %s23, 1
      %p151 = por %p149, %p150
      %p152 = scmp.ne.s32.totalorder %s141, %s142
      %p153 = scmp.eq.s32.totalorder %s23, 0
      %p154 = por %p152, %p153
      %p155 = scmp.ne.s32.totalorder %s141, %s142
      %p156 = scmp.eq.s32.totalorder %s24, 1
      %p157 = por %p155, %p156
      %p159 = scmp.ne.s32.totalorder %s142, %s158
      %p160 = scmp.eq.s32.totalorder %s24, 0
      %p161 = por %p159, %p160
      %p162 = scmp.le.s32.totalorder 1, %s18
      %p163 = scmp.lt.s32.totalorder %s18, 3
      %p164 = pnand %p162, %p163
      %p165 = pneg %p164
      // Predicated region
      $region9: #{tpu_custom_call.1} parent=5 // pred_check
        _
      $region10: #{tpu_custom_call.1} parent=5 // pred_check_branch
        %167 = sbr.rel (%p164) target = $region12
      $region11: #{tpu_custom_call.1} parent=5 // pred_region
        %s168 = ssub.s32 %s18, 1
        // Predicated region
        $region13: #{tpu_custom_call.1} parent=11 // pred_check
          %p169 = pneg %p65
        $region14: #{tpu_custom_call.1} parent=11 // pred_check_branch
          %171 = sbr.rel (%p169) target = $region16
        $region15: #{tpu_custom_call.1} parent=11 // pred_region
          _
        $region16: #{tpu_custom_call.1} parent=11 // pred_fallthru
          _
        // Predicated region
        $region17: #{tpu_custom_call.1} parent=11 // pred_check
          %p172 = pneg %p86
        $region18: #{tpu_custom_call.1} parent=11 // pred_check_branch
          %174 = sbr.rel (%p172) target = $region20
        $region19: #{tpu_custom_call.1} parent=11 // pred_region
          _
        $region20: #{tpu_custom_call.1} parent=11 // pred_fallthru
          _
        // Predicated region
        $region21: #{tpu_custom_call.1} parent=11 // pred_check
          %p175 = pneg %p107
        $region22: #{tpu_custom_call.1} parent=11 // pred_check_branch
          %177 = sbr.rel (%p175) target = $region24
        $region23: #{tpu_custom_call.1} parent=11 // pred_region
          %s179 = ssub.s32 256, 256
          %180 = vsyncadd [#allocation6], %s179
          %s181 = sshll.u32 [#allocation5], 4
          %s182 = int_to_ptr.vmem [resolvable:$true] %s181
          %187 = dma.hbm_to_vmem [thread:$0]  %s3, 256, %s182, [#allocation6], 64, 64, 4
        $region24: #{tpu_custom_call.1} parent=11 // pred_fallthru
          _
        // Predicated region
        $region25: #{tpu_custom_call.1} parent=11 // pred_check
          %p188 = pneg %p128
        $region26: #{tpu_custom_call.1} parent=11 // pred_check_branch
          %190 = sbr.rel (%p188) target = $region28
        $region27: #{tpu_custom_call.1} parent=11 // pred_region
          %s192 = ssub.s32 256, 256
          %193 = vsyncadd [#allocation6], %s192
          %s194 = sshll.u32 [#allocation7], 4
          %s195 = int_to_ptr.vmem [resolvable:$true] %s194
          %200 = dma.hbm_to_vmem [thread:$0]  %s4, 256, %s195, [#allocation6], 64, 64, 4
        $region28: #{tpu_custom_call.1} parent=11 // pred_fallthru
          _
      $region12: #{tpu_custom_call.1} parent=5 // pred_fallthru
        _
      %p201 = scmp.lt.s32.totalorder %s18, 2
      // Predicated region
      $region29: #{tpu_custom_call.1} parent=5 // pred_check
        %p202 = pneg %p201
      $region30: #{tpu_custom_call.1} parent=5 // pred_check_branch
        %204 = sbr.rel (%p202) target = $region32
      $region31: #{tpu_custom_call.1} parent=5 // pred_region
        // Predicated region
        $region33: #{tpu_custom_call.1} parent=31 // pred_check
          %p205 = pneg %p38
        $region34: #{tpu_custom_call.1} parent=31 // pred_check_branch
          %207 = sbr.rel (%p205) target = $region36
        $region35: #{tpu_custom_call.1} parent=31 // pred_region
          %s208 = sand.u32 %s28, 1
          %s209 = scalar_lea.sflag [#allocation3], %s208
          %s210 = sand.u32 %s28, 1
          %s211 = smul.addr %s210, 8
          %s212 = scalar_lea.vmem [#allocation2], %s211
          %s214 = ssub.s32 128, 128
          %215 = vsyncadd %s209, %s214
          %s216 = smul.addr %s18, 128
          %s217 = scalar_lea.hbm %s0, %s216
          %s219 = sshll.u32 %s212, 4
          %s220 = int_to_ptr.vmem [resolvable:$true] %s219
          %222 = dma.hbm_to_vmem [thread:$0]  %s217, 128, %s220, %s209
        $region36: #{tpu_custom_call.1} parent=31 // pred_fallthru
          _
      $region32: #{tpu_custom_call.1} parent=5 // pred_fallthru
        _
      %p223 = scmp.le.s32.totalorder 1, %s18
      %p224 = scmp.lt.s32.totalorder %s18, 3
      %p225 = pnand %p223, %p224
      %p226 = pneg %p225
      // Predicated region
      $region37: #{tpu_custom_call.1} parent=5 // pred_check
        _
      $region38: #{tpu_custom_call.1} parent=5 // pred_check_branch
        %228 = sbr.rel (%p225) target = $region40
      $region39: #{tpu_custom_call.1} parent=5 // pred_region
        %s229 = ssub.s32 %s18, 1
        %s230 = sand.u32 %s31, 1
        %s231 = scalar_lea.sflag [#allocation3], %s230
        %s232 = sand.u32 %s31, 1
        %s233 = smul.addr %s232, 8
        %s234 = scalar_lea.vmem [#allocation2], %s233
        // Predicated region
        $region41: #{tpu_custom_call.1} parent=39 // pred_check
          %p235 = pneg %p44
        $region42: #{tpu_custom_call.1} parent=39 // pred_check_branch
          %237 = sbr.rel (%p235) target = $region44
        $region43: #{tpu_custom_call.1} parent=39 // pred_region
          %238 = dma.done %s231, 128
        $region44: #{tpu_custom_call.1} parent=39 // pred_fallthru
          _
        // Predicated region
        $region45: #{tpu_custom_call.1} parent=39 // pred_check
          %p239 = pneg %p107
        $region46: #{tpu_custom_call.1} parent=39 // pred_check_branch
          %241 = sbr.rel (%p239) target = $region48
        $region47: #{tpu_custom_call.1} parent=39 // pred_region
          %242 = dma.done [#allocation6], 256
        $region48: #{tpu_custom_call.1} parent=39 // pred_fallthru
          _
        // Predicated region
        $region49: #{tpu_custom_call.1} parent=39 // pred_check
          %p243 = pneg %p128
        $region50: #{tpu_custom_call.1} parent=39 // pred_check_branch
          %245 = sbr.rel (%p243) target = $region52
        $region51: #{tpu_custom_call.1} parent=39 // pred_region
          %246 = dma.done [#allocation6], 256
        $region52: #{tpu_custom_call.1} parent=39 // pred_fallthru
          _
        %s247 = sand.u32 %s31, 1
        %s248 = scalar_lea.sflag [#allocation3], %s247
        %s249 = sand.u32 %s31, 1
        %s250 = smul.addr %s249, 8
        %s251 = scalar_lea.vmem [#allocation2], %s250
        %p252 = pneg %p44
        %p253 = pneg %p41
        %p254 = pneg %p65
        %p255 = pneg %p62
        %p256 = pneg %p86
        %p257 = pneg %p83
        %p258 = pneg %p107
        %p259 = pneg %p104
        %p260 = pneg %p128
        %p261 = pneg %p125
        %p262 = pneg %p154
        %p263 = pneg %p151
        %s264 = sand.u32 %s141, 1
        %s265 = scalar_lea.sflag [#allocation4], %s264
        %s266 = sand.u32 %s141, 1
        %s267 = smul.addr %s266, 8
        %s268 = scalar_lea.vmem [#allocation8], %s267
        %v270 = vld [vmem:[%s234] sm:$0xff]
        %vm271 = vcmask 261120
        %v272 = vsel %vm271, %v270, 0.0
        %273 = vadd.xlane.f32.xlu0 %v272
        %v274 = vpop.xlane.xlu0 %273
        %v275 = vrcp.pop 32.0
        %v276 = vmul.f32 %v274, %v275
        %v277 = vsub.f32 %v270, %v276
        %v278 = vmul.f32 %v277, %v277
        %v279 = vsel %vm271, %v278, 0.0
        %280 = vadd.xlane.f32.xlu0 %v279
        %v281 = vpop.xlane.xlu0 %280
        %v282 = vmul.f32 %v281, %v275
        %v283 = vadd.f32 %v282, 1e-05
        %v284 = vrsqrt.pop %v283
        %v285 = vmul.f32 %v277, %v284
        %v286 = vld [vmem:[%s1] sm:$0x1]
        %v288 = vlaneseq
        %v289 = vshrl.u32 %v288, 7
        %v290 = vsub.s32 0, %v289
        %v291 = vrot.slane %v286, %v290
        %v293 = vmul.f32 %v285, %v291
        %v294 = vld [vmem:[%s2] sm:$0x1]
        %v296 = vlaneseq
        %v297 = vshrl.u32 %v296, 7
        %v298 = vsub.s32 0, %v297
        %v299 = vrot.slane %v294, %v298
        %v301 = vadd.f32 %v293, %v299
        %v302 = vpack.c.bf16 %v301, %v301
        %v303 = vld [vmem:[#allocation5] sm:$0xf]
        %v304 = vld [vmem:[#allocation5 + $0x4] sm:$0xf]
        %v305 = vld [vmem:[#allocation5 + $0x8] sm:$0xf]
        %v306 = vld [vmem:[#allocation5 + $0xc] sm:$0xf]
        %v311 = vunpack.c.l.b16 %v303
        %v312 = vunpack.c.l.b16 %v304
        %v313 = vunpack.c.l.b16 %v305
        %v314 = vunpack.c.l.b16 %v306
        %v315 = vpack.c.b16 %v312, %v311
        %v316 = vpack.c.b16 %v314, %v313
        %v320 = vsel %vm271, %v302, 0
        %322 = vmatprep.subr.bf16.mxu0 0
        %323 = vmatpush1.bf16.msra.mxu0 %v315
        %324 = vmatprep.subr.bf16.mxu0 0
        %325 = vmatpush1.bf16.msra.mxu0 %v316
        %326 = vmatprep.subr.bf16.mxu0 0
        %327 = vmatpush1.bf16.msra.mxu0 0
        %328 = vmatprep.subr.bf16.mxu0 0
        %329 = vmatpush1.bf16.msra.mxu0 0
        %330 = vmatprep.subr.bf16.mxu0 0
        %331 = vmatpush1.bf16.msra.mxu0 0
        %332 = vmatprep.subr.bf16.mxu0 0
        %333 = vmatpush1.bf16.msra.mxu0 0
        %334 = vmatprep.subr.bf16.mxu0 0
        %335 = vmatpush1.bf16.msra.mxu0 0
        %336 = vmatprep.subr.bf16.mxu0 0
        %337 = vmatpush1.bf16.msra.mxu0 0
        %338 = vmatprep.subr.bf16.mxu0 0
        %339 = vmatpush1.bf16.msra.mxu0 0
        %340 = vmatprep.subr.bf16.mxu0 0
        %341 = vmatpush1.bf16.msra.mxu0 0
        %342 = vmatprep.subr.bf16.mxu0 0
        %343 = vmatpush1.bf16.msra.mxu0 0
        %344 = vmatprep.subr.bf16.mxu0 0
        %345 = vmatpush1.bf16.msra.mxu0 0
        %346 = vmatprep.subr.bf16.mxu0 0
        %347 = vmatpush1.bf16.msra.mxu0 0
        %348 = vmatprep.subr.bf16.mxu0 0
        %349 = vmatpush1.bf16.msra.mxu0 0
        %350 = vmatprep.subr.bf16.mxu0 0
        %351 = vmatpush1.bf16.msra.mxu0 0
        %352 = vmatprep.subr.bf16.mxu0 0
        %353 = vmatpush1.bf16.msra.mxu0 0
        %354 = vmatprep.mubr.bf16.mxu0 0
        %355 = vmatmul.mubr.bf16.gmra.mrb[0].mxu0 %v320
        %v356 = vpop.f32.mrb[0].mxu0
        %v357 = vadd.f32 0.0, %v356
        %v358 = vpop.f32.mrb[0].mxu0
        %v359 = vpop.f32.mrb[0].mxu0
        %v360 = vpop.f32.mrb[0].mxu0
        %361 = vdwg.mxu0
        %v362 = vpack.c.bf16 %v357, %v357
        %364 = vrot.lane.b32.xlu0 %v362, 96
        %v365 = vpop.permute.xlu0 %364
        %vm366 = vcmask 64512
        %v368 = vsel %vm366, %v362, 0
        %v371 = vsel %vm366, %v365, 0
        %373 = vmatprep.subr.bf16.mxu0 0
        %374 = vmatpush1.bf16.xpose.msra.mxu0 %v371
        %375 = vmatprep.subr.bf16.mxu0 0
        %376 = vmatpush1.bf16.xpose.msra.mxu0 0
        %377 = vmatprep.subr.bf16.mxu0 0
        %378 = vmatpush1.bf16.xpose.msra.mxu0 0
        %379 = vmatprep.subr.bf16.mxu0 0
        %380 = vmatpush1.bf16.xpose.msra.mxu0 0
        %381 = vmatprep.subr.bf16.mxu0 0
        %382 = vmatpush1.bf16.xpose.msra.mxu0 0
        %383 = vmatprep.subr.bf16.mxu0 0
        %384 = vmatpush1.bf16.xpose.msra.mxu0 0
        %385 = vmatprep.subr.bf16.mxu0 0
        %386 = vmatpush1.bf16.xpose.msra.mxu0 0
        %387 = vmatprep.subr.bf16.mxu0 0
        %388 = vmatpush1.bf16.xpose.msra.mxu0 0
        %389 = vmatprep.subr.bf16.mxu0 0
        %390 = vmatpush1.bf16.xpose.msra.mxu0 0
        %391 = vmatprep.subr.bf16.mxu0 0
        %392 = vmatpush1.bf16.xpose.msra.mxu0 0
        %393 = vmatprep.subr.bf16.mxu0 0
        %394 = vmatpush1.bf16.xpose.msra.mxu0 0
        %395 = vmatprep.subr.bf16.mxu0 0
        %396 = vmatpush1.bf16.xpose.msra.mxu0 0
        %397 = vmatprep.subr.bf16.mxu0 0
        %398 = vmatpush1.bf16.xpose.msra.mxu0 0
        %399 = vmatprep.subr.bf16.mxu0 0
        %400 = vmatpush1.bf16.xpose.msra.mxu0 0
        %401 = vmatprep.subr.bf16.mxu0 0
        %402 = vmatpush1.bf16.xpose.msra.mxu0 0
        %403 = vmatprep.subr.bf16.mxu0 0
        %404 = vmatpush1.bf16.xpose.msra.mxu0 0
        %405 = vmatprep.mubr.bf16.mxu0 0
        %406 = vmatmul.mubr.bf16.gmra.mrb[0].mxu0 %v368
        %v407 = vpop.f32.mrb[0].mxu0
        %v408 = vadd.f32 0.0, %v407
        %v409 = vpop.f32.mrb[0].mxu0
        %v410 = vpop.f32.mrb[0].mxu0
        %v411 = vpop.f32.mrb[0].mxu0
        %412 = vdwg.mxu0
        %v413 = vsel %vm366, %v408, -inf
        %414 = vmax.xlane.f32.xlu0 %v413
        %v415 = vpop.xlane.xlu0 %414
        %v416 = vsub.f32 %v408, %v415
        %v417 = vmul.f32 %v416, 1.442695
        %v418 = vpow.pop %v417
        %v419 = vsel %vm366, %v418, 0.0
        %420 = vadd.xlane.f32.xlu0 %v419
        %v421 = vpop.xlane.xlu0 %420
        %v422 = vrcp.pop %v421
        %v423 = vmul.f32 %v418, %v422
        %v424 = vpack.c.bf16 %v423, %v423
        %425 = vrot.lane.b32.xlu0 %v362, 64
        %v426 = vpop.permute.xlu0 %425
        %v428 = vsel %vm366, %v424, 0
        %vm430 = vcmask 1043456
        %v432 = vsel %vm430, %v426, 0
        %434 = vmatprep.subr.bf16.mxu0 0
        %435 = vmatpush1.bf16.msra.mxu0 %v432
        %436 = vmatprep.subr.bf16.mxu0 0
        %437 = vmatpush1.bf16.msra.mxu0 0
        %438 = vmatprep.subr.bf16.mxu0 0
        %439 = vmatpush1.bf16.msra.mxu0 0
        %440 = vmatprep.subr.bf16.mxu0 0
        %441 = vmatpush1.bf16.msra.mxu0 0
        %442 = vmatprep.subr.bf16.mxu0 0
        %443 = vmatpush1.bf16.msra.mxu0 0
        %444 = vmatprep.subr.bf16.mxu0 0
        %445 = vmatpush1.bf16.msra.mxu0 0
        %446 = vmatprep.subr.bf16.mxu0 0
        %447 = vmatpush1.bf16.msra.mxu0 0
        %448 = vmatprep.subr.bf16.mxu0 0
        %449 = vmatpush1.bf16.msra.mxu0 0
        %450 = vmatprep.subr.bf16.mxu0 0
        %451 = vmatpush1.bf16.msra.mxu0 0
        %452 = vmatprep.subr.bf16.mxu0 0
        %453 = vmatpush1.bf16.msra.mxu0 0
        %454 = vmatprep.subr.bf16.mxu0 0
        %455 = vmatpush1.bf16.msra.mxu0 0
        %456 = vmatprep.subr.bf16.mxu0 0
        %457 = vmatpush1.bf16.msra.mxu0 0
        %458 = vmatprep.subr.bf16.mxu0 0
        %459 = vmatpush1.bf16.msra.mxu0 0
        %460 = vmatprep.subr.bf16.mxu0 0
        %461 = vmatpush1.bf16.msra.mxu0 0
        %462 = vmatprep.subr.bf16.mxu0 0
        %463 = vmatpush1.bf16.msra.mxu0 0
        %464 = vmatprep.subr.bf16.mxu0 0
        %465 = vmatpush1.bf16.msra.mxu0 0
        %466 = vmatprep.mubr.bf16.mxu0 0
        %467 = vmatmul.mubr.bf16.gmra.mrb[0].mxu0 %v428
        %v468 = vpop.f32.mrb[0].mxu0
        %v469 = vadd.f32 0.0, %v468
        %v470 = vpop.f32.mrb[0].mxu0
        %v471 = vpop.f32.mrb[0].mxu0
        %v472 = vpop.f32.mrb[0].mxu0
        %473 = vdwg.mxu0
        %474 = vrot.lane.b32.xlu0 %v362, 120
        %v475 = vpop.permute.xlu0 %474
        %476 = vrot.lane.b32.xlu0 %v362, 88
        %v477 = vpop.permute.xlu0 %476
        %v479 = vsel %vm366, %v475, 0
        %v482 = vsel %vm366, %v477, 0
        %484 = vmatprep.subr.bf16.mxu0 0
        %485 = vmatpush1.bf16.xpose.msra.mxu0 %v482
        %486 = vmatprep.subr.bf16.mxu0 0
        %487 = vmatpush1.bf16.xpose.msra.mxu0 0
        %488 = vmatprep.subr.bf16.mxu0 0
        %489 = vmatpush1.bf16.xpose.msra.mxu0 0
        %490 = vmatprep.subr.bf16.mxu0 0
        %491 = vmatpush1.bf16.xpose.msra.mxu0 0
        %492 = vmatprep.subr.bf16.mxu0 0
        %493 = vmatpush1.bf16.xpose.msra.mxu0 0
        %494 = vmatprep.subr.bf16.mxu0 0
        %495 = vmatpush1.bf16.xpose.msra.mxu0 0
        %496 = vmatprep.subr.bf16.mxu0 0
        %497 = vmatpush1.bf16.xpose.msra.mxu0 0
        %498 = vmatprep.subr.bf16.mxu0 0
        %499 = vmatpush1.bf16.xpose.msra.mxu0 0
        %500 = vmatprep.subr.bf16.mxu0 0
        %501 = vmatpush1.bf16.xpose.msra.mxu0 0
        %502 = vmatprep.subr.bf16.mxu0 0
        %503 = vmatpush1.bf16.xpose.msra.mxu0 0
        %504 = vmatprep.subr.bf16.mxu0 0
        %505 = vmatpush1.bf16.xpose.msra.mxu0 0
        %506 = vmatprep.subr.bf16.mxu0 0
        %507 = vmatpush1.bf16.xpose.msra.mxu0 0
        %508 = vmatprep.subr.bf16.mxu0 0
        %509 = vmatpush1.bf16.xpose.msra.mxu0 0
        %510 = vmatprep.subr.bf16.mxu0 0
        %511 = vmatpush1.bf16.xpose.msra.mxu0 0
        %512 = vmatprep.subr.bf16.mxu0 0
        %513 = vmatpush1.bf16.xpose.msra.mxu0 0
        %514 = vmatprep.subr.bf16.mxu0 0
        %515 = vmatpush1.bf16.xpose.msra.mxu0 0
        %516 = vmatprep.mubr.bf16.mxu0 0
        %517 = vmatmul.mubr.bf16.gmra.mrb[0].mxu0 %v479
        %v518 = vpop.f32.mrb[0].mxu0
        %v519 = vadd.f32 0.0, %v518
        %v520 = vpop.f32.mrb[0].mxu0
        %v521 = vpop.f32.mrb[0].mxu0
        %v522 = vpop.f32.mrb[0].mxu0
        %523 = vdwg.mxu0
        %v524 = vsel %vm366, %v519, -inf
        %525 = vmax.xlane.f32.xlu0 %v524
        %v526 = vpop.xlane.xlu0 %525
        %v527 = vsub.f32 %v519, %v526
        %v528 = vmul.f32 %v527, 1.442695
        %v529 = vpow.pop %v528
        %v530 = vsel %vm366, %v529, 0.0
        %531 = vadd.xlane.f32.xlu0 %v530
        %v532 = vpop.xlane.xlu0 %531
        %v533 = vrcp.pop %v532
        %v534 = vmul.f32 %v529, %v533
        %v535 = vpack.c.bf16 %v534, %v534
        %536 = vrot.lane.b32.xlu0 %v362, 56
        %v537 = vpop.permute.xlu0 %536
        %v539 = vsel %vm366, %v535, 0
        %v542 = vsel %vm430, %v537, 0
        %544 = vmatprep.subr.bf16.mxu0 0
        %545 = vmatpush1.bf16.msra.mxu0 %v542
        %546 = vmatprep.subr.bf16.mxu0 0
        %547 = vmatpush1.bf16.msra.mxu0 0
        %548 = vmatprep.subr.bf16.mxu0 0
        %549 = vmatpush1.bf16.msra.mxu0 0
        %550 = vmatprep.subr.bf16.mxu0 0
        %551 = vmatpush1.bf16.msra.mxu0 0
        %552 = vmatprep.subr.bf16.mxu0 0
        %553 = vmatpush1.bf16.msra.mxu0 0
        %554 = vmatprep.subr.bf16.mxu0 0
        %555 = vmatpush1.bf16.msra.mxu0 0
        %556 = vmatprep.subr.bf16.mxu0 0
        %557 = vmatpush1.bf16.msra.mxu0 0
        %558 = vmatprep.subr.bf16.mxu0 0
        %559 = vmatpush1.bf16.msra.mxu0 0
        %560 = vmatprep.subr.bf16.mxu0 0
        %561 = vmatpush1.bf16.msra.mxu0 0
        %562 = vmatprep.subr.bf16.mxu0 0
        %563 = vmatpush1.bf16.msra.mxu0 0
        %564 = vmatprep.subr.bf16.mxu0 0
        %565 = vmatpush1.bf16.msra.mxu0 0
        %566 = vmatprep.subr.bf16.mxu0 0
        %567 = vmatpush1.bf16.msra.mxu0 0
        %568 = vmatprep.subr.bf16.mxu0 0
        %569 = vmatpush1.bf16.msra.mxu0 0
        %570 = vmatprep.subr.bf16.mxu0 0
        %571 = vmatpush1.bf16.msra.mxu0 0
        %572 = vmatprep.subr.bf16.mxu0 0
        %573 = vmatpush1.bf16.msra.mxu0 0
        %574 = vmatprep.subr.bf16.mxu0 0
        %575 = vmatpush1.bf16.msra.mxu0 0
        %576 = vmatprep.mubr.bf16.mxu0 0
        %577 = vmatmul.mubr.bf16.gmra.mrb[0].mxu0 %v539
        %v578 = vpop.f32.mrb[0].mxu0
        %v579 = vadd.f32 0.0, %v578
        %v580 = vpop.f32.mrb[0].mxu0
        %v581 = vpop.f32.mrb[0].mxu0
        %v582 = vpop.f32.mrb[0].mxu0
        %583 = vdwg.mxu0
        %584 = vrot.lane.b32.xlu0 %v362, 112
        %v585 = vpop.permute.xlu0 %584
        %586 = vrot.lane.b32.xlu0 %v362, 80
        %v587 = vpop.permute.xlu0 %586
        %v589 = vsel %vm366, %v585, 0
        %v592 = vsel %vm366, %v587, 0
        %594 = vmatprep.subr.bf16.mxu0 0
        %595 = vmatpush1.bf16.xpose.msra.mxu0 %v592
        %596 = vmatprep.subr.bf16.mxu0 0
        %597 = vmatpush1.bf16.xpose.msra.mxu0 0
        %598 = vmatprep.subr.bf16.mxu0 0
        %599 = vmatpush1.bf16.xpose.msra.mxu0 0
        %600 = vmatprep.subr.bf16.mxu0 0
        %601 = vmatpush1.bf16.xpose.msra.mxu0 0
        %602 = vmatprep.subr.bf16.mxu0 0
        %603 = vmatpush1.bf16.xpose.msra.mxu0 0
        %604 = vmatprep.subr.bf16.mxu0 0
        %605 = vmatpush1.bf16.xpose.msra.mxu0 0
        %606 = vmatprep.subr.bf16.mxu0 0
        %607 = vmatpush1.bf16.xpose.msra.mxu0 0
        %608 = vmatprep.subr.bf16.mxu0 0
        %609 = vmatpush1.bf16.xpose.msra.mxu0 0
        %610 = vmatprep.subr.bf16.mxu0 0
        %611 = vmatpush1.bf16.xpose.msra.mxu0 0
        %612 = vmatprep.subr.bf16.mxu0 0
        %613 = vmatpush1.bf16.xpose.msra.mxu0 0
        %614 = vmatprep.subr.bf16.mxu0 0
        %615 = vmatpush1.bf16.xpose.msra.mxu0 0
        %616 = vmatprep.subr.bf16.mxu0 0
        %617 = vmatpush1.bf16.xpose.msra.mxu0 0
        %618 = vmatprep.subr.bf16.mxu0 0
        %619 = vmatpush1.bf16.xpose.msra.mxu0 0
        %620 = vmatprep.subr.bf16.mxu0 0
        %621 = vmatpush1.bf16.xpose.msra.mxu0 0
        %622 = vmatprep.subr.bf16.mxu0 0
        %623 = vmatpush1.bf16.xpose.msra.mxu0 0
        %624 = vmatprep.subr.bf16.mxu0 0
        %625 = vmatpush1.bf16.xpose.msra.mxu0 0
        %626 = vmatprep.mubr.bf16.mxu0 0
        %627 = vmatmul.mubr.bf16.gmra.mrb[0].mxu0 %v589
        %v628 = vpop.f32.mrb[0].mxu0
        %v629 = vadd.f32 0.0, %v628
        %v630 = vpop.f32.mrb[0].mxu0
        %v631 = vpop.f32.mrb[0].mxu0
        %v632 = vpop.f32.mrb[0].mxu0
        %633 = vdwg.mxu0
        %v634 = vsel %vm366, %v629, -inf
        %635 = vmax.xlane.f32.xlu0 %v634
        %v636 = vpop.xlane.xlu0 %635
        %v637 = vsub.f32 %v629, %v636
        %v638 = vmul.f32 %v637, 1.442695
        %v639 = vpow.pop %v638
        %v640 = vsel %vm366, %v639, 0.0
        %641 = vadd.xlane.f32.xlu0 %v640
        %v642 = vpop.xlane.xlu0 %641
        %v643 = vrcp.pop %v642
        %v644 = vmul.f32 %v639, %v643
        %v645 = vpack.c.bf16 %v644, %v644
        %646 = vrot.lane.b32.xlu0 %v362, 48
        %v647 = vpop.permute.xlu0 %646
        %v649 = vsel %vm366, %v645, 0
        %v652 = vsel %vm430, %v647, 0
        %654 = vmatprep.subr.bf16.mxu0 0
        %655 = vmatpush1.bf16.msra.mxu0 %v652
        %656 = vmatprep.subr.bf16.mxu0 0
        %657 = vmatpush1.bf16.msra.mxu0 0
        %658 = vmatprep.subr.bf16.mxu0 0
        %659 = vmatpush1.bf16.msra.mxu0 0
        %660 = vmatprep.subr.bf16.mxu0 0
        %661 = vmatpush1.bf16.msra.mxu0 0
        %662 = vmatprep.subr.bf16.mxu0 0
        %663 = vmatpush1.bf16.msra.mxu0 0
        %664 = vmatprep.subr.bf16.mxu0 0
        %665 = vmatpush1.bf16.msra.mxu0 0
        %666 = vmatprep.subr.bf16.mxu0 0
        %667 = vmatpush1.bf16.msra.mxu0 0
        %668 = vmatprep.subr.bf16.mxu0 0
        %669 = vmatpush1.bf16.msra.mxu0 0
        %670 = vmatprep.subr.bf16.mxu0 0
        %671 = vmatpush1.bf16.msra.mxu0 0
        %672 = vmatprep.subr.bf16.mxu0 0
        %673 = vmatpush1.bf16.msra.mxu0 0
        %674 = vmatprep.subr.bf16.mxu0 0
        %675 = vmatpush1.bf16.msra.mxu0 0
        %676 = vmatprep.subr.bf16.mxu0 0
        %677 = vmatpush1.bf16.msra.mxu0 0
        %678 = vmatprep.subr.bf16.mxu0 0
        %679 = vmatpush1.bf16.msra.mxu0 0
        %680 = vmatprep.subr.bf16.mxu0 0
        %681 = vmatpush1.bf16.msra.mxu0 0
        %682 = vmatprep.subr.bf16.mxu0 0
        %683 = vmatpush1.bf16.msra.mxu0 0
        %684 = vmatprep.subr.bf16.mxu0 0
        %685 = vmatpush1.bf16.msra.mxu0 0
        %686 = vmatprep.mubr.bf16.mxu0 0
        %687 = vmatmul.mubr.bf16.gmra.mrb[0].mxu0 %v649
        %v688 = vpop.f32.mrb[0].mxu0
        %v689 = vadd.f32 0.0, %v688
        %v690 = vpop.f32.mrb[0].mxu0
        %v691 = vpop.f32.mrb[0].mxu0
        %v692 = vpop.f32.mrb[0].mxu0
        %693 = vdwg.mxu0
        %694 = vrot.lane.b32.xlu0 %v362, 104
        %v695 = vpop.permute.xlu0 %694
        %696 = vrot.lane.b32.xlu0 %v362, 72
        %v697 = vpop.permute.xlu0 %696
        %v699 = vsel %vm366, %v695, 0
        %v702 = vsel %vm366, %v697, 0
        %704 = vmatprep.subr.bf16.mxu0 0
        %705 = vmatpush1.bf16.xpose.msra.mxu0 %v702
        %706 = vmatprep.subr.bf16.mxu0 0
        %707 = vmatpush1.bf16.xpose.msra.mxu0 0
        %708 = vmatprep.subr.bf16.mxu0 0
        %709 = vmatpush1.bf16.xpose.msra.mxu0 0
        %710 = vmatprep.subr.bf16.mxu0 0
        %711 = vmatpush1.bf16.xpose.msra.mxu0 0
        %712 = vmatprep.subr.bf16.mxu0 0
        %713 = vmatpush1.bf16.xpose.msra.mxu0 0
        %714 = vmatprep.subr.bf16.mxu0 0
        %715 = vmatpush1.bf16.xpose.msra.mxu0 0
        %716 = vmatprep.subr.bf16.mxu0 0
        %717 = vmatpush1.bf16.xpose.msra.mxu0 0
        %718 = vmatprep.subr.bf16.mxu0 0
        %719 = vmatpush1.bf16.xpose.msra.mxu0 0
        %720 = vmatprep.subr.bf16.mxu0 0
        %721 = vmatpush1.bf16.xpose.msra.mxu0 0
        %722 = vmatprep.subr.bf16.mxu0 0
        %723 = vmatpush1.bf16.xpose.msra.mxu0 0
        %724 = vmatprep.subr.bf16.mxu0 0
        %725 = vmatpush1.bf16.xpose.msra.mxu0 0
        %726 = vmatprep.subr.bf16.mxu0 0
        %727 = vmatpush1.bf16.xpose.msra.mxu0 0
        %728 = vmatprep.subr.bf16.mxu0 0
        %729 = vmatpush1.bf16.xpose.msra.mxu0 0
        %730 = vmatprep.subr.bf16.mxu0 0
        %731 = vmatpush1.bf16.xpose.msra.mxu0 0
        %732 = vmatprep.subr.bf16.mxu0 0
        %733 = vmatpush1.bf16.xpose.msra.mxu0 0
        %734 = vmatprep.subr.bf16.mxu0 0
        %735 = vmatpush1.bf16.xpose.msra.mxu0 0
        %736 = vmatprep.mubr.bf16.mxu0 0
        %737 = vmatmul.mubr.bf16.gmra.mrb[0].mxu0 %v699
        %v738 = vpop.f32.mrb[0].mxu0
        %v739 = vadd.f32 0.0, %v738
        %v740 = vpop.f32.mrb[0].mxu0
        %v741 = vpop.f32.mrb[0].mxu0
        %v742 = vpop.f32.mrb[0].mxu0
        %743 = vdwg.mxu0
        %v744 = vsel %vm366, %v739, -inf
        %745 = vmax.xlane.f32.xlu0 %v744
        %v746 = vpop.xlane.xlu0 %745
        %v747 = vsub.f32 %v739, %v746
        %v748 = vmul.f32 %v747, 1.442695
        %v749 = vpow.pop %v748
        %v750 = vsel %vm366, %v749, 0.0
        %751 = vadd.xlane.f32.xlu0 %v750
        %v752 = vpop.xlane.xlu0 %751
        %v753 = vrcp.pop %v752
        %v754 = vmul.f32 %v749, %v753
        %v755 = vpack.c.bf16 %v754, %v754
        %756 = vrot.lane.b32.xlu0 %v362, 40
        %v757 = vpop.permute.xlu0 %756
        %v759 = vsel %vm366, %v755, 0
        %v762 = vsel %vm430, %v757, 0
        %764 = vmatprep.subr.bf16.mxu0 0
        %765 = vmatpush1.bf16.msra.mxu0 %v762
        %766 = vmatprep.subr.bf16.mxu0 0
        %767 = vmatpush1.bf16.msra.mxu0 0
        %768 = vmatprep.subr.bf16.mxu0 0
        %769 = vmatpush1.bf16.msra.mxu0 0
        %770 = vmatprep.subr.bf16.mxu0 0
        %771 = vmatpush1.bf16.msra.mxu0 0
        %772 = vmatprep.subr.bf16.mxu0 0
        %773 = vmatpush1.bf16.msra.mxu0 0
        %774 = vmatprep.subr.bf16.mxu0 0
        %775 = vmatpush1.bf16.msra.mxu0 0
        %776 = vmatprep.subr.bf16.mxu0 0
        %777 = vmatpush1.bf16.msra.mxu0 0
        %778 = vmatprep.subr.bf16.mxu0 0
        %779 = vmatpush1.bf16.msra.mxu0 0
        %780 = vmatprep.subr.bf16.mxu0 0
        %781 = vmatpush1.bf16.msra.mxu0 0
        %782 = vmatprep.subr.bf16.mxu0 0
        %783 = vmatpush1.bf16.msra.mxu0 0
        %784 = vmatprep.subr.bf16.mxu0 0
        %785 = vmatpush1.bf16.msra.mxu0 0
        %786 = vmatprep.subr.bf16.mxu0 0
        %787 = vmatpush1.bf16.msra.mxu0 0
        %788 = vmatprep.subr.bf16.mxu0 0
        %789 = vmatpush1.bf16.msra.mxu0 0
        %790 = vmatprep.subr.bf16.mxu0 0
        %791 = vmatpush1.bf16.msra.mxu0 0
        %792 = vmatprep.subr.bf16.mxu0 0
        %793 = vmatpush1.bf16.msra.mxu0 0
        %794 = vmatprep.subr.bf16.mxu0 0
        %795 = vmatpush1.bf16.msra.mxu0 0
        %796 = vmatprep.mubr.bf16.mxu0 0
        %797 = vmatmul.mubr.bf16.gmra.mrb[0].mxu0 %v759
        %v798 = vpop.f32.mrb[0].mxu0
        %v799 = vadd.f32 0.0, %v798
        %v800 = vpop.f32.mrb[0].mxu0
        %v801 = vpop.f32.mrb[0].mxu0
        %v802 = vpop.f32.mrb[0].mxu0
        %803 = vdwg.mxu0
        %805 = vrot.lane.b32.xlu0 %v579, 8
        %v806 = vpop.permute.xlu0 %805
        %809 = vrot.lane.b32.xlu0 %v689, 16
        %v810 = vpop.permute.xlu0 %809
        %813 = vrot.lane.b32.xlu0 %v799, 24
        %v814 = vpop.permute.xlu0 %813
        %v816 = vsel %vm366, %v469, %v806
        %vm817 = vcmask 130048
        %v818 = vsel %vm817, %v816, %v810
        %vm819 = vcmask 195584
        %v820 = vsel %vm819, %v818, %v814
        %v821 = vpack.c.bf16 %v820, %v820
        %v822 = vld [vmem:[#allocation7] sm:$0xf]
        %v823 = vld [vmem:[#allocation7 + $0x4] sm:$0xf]
        %v824 = vld [vmem:[#allocation7 + $0x8] sm:$0xf]
        %v825 = vld [vmem:[#allocation7 + $0xc] sm:$0xf]
        %v830 = vunpack.c.l.b16 %v822
        %v831 = vunpack.c.l.b16 %v823
        %v832 = vunpack.c.l.b16 %v824
        %v833 = vunpack.c.l.b16 %v825
        %v834 = vpack.c.b16 %v831, %v830
        %v835 = vpack.c.b16 %v833, %v832
        %v839 = vsel %vm271, %v821, 0
        %841 = vmatprep.subr.bf16.mxu0 0
        %842 = vmatpush1.bf16.msra.mxu0 %v834
        %843 = vmatprep.subr.bf16.mxu0 0
        %844 = vmatpush1.bf16.msra.mxu0 %v835
        %845 = vmatprep.subr.bf16.mxu0 0
        %846 = vmatpush1.bf16.msra.mxu0 0
        %847 = vmatprep.subr.bf16.mxu0 0
        %848 = vmatpush1.bf16.msra.mxu0 0
        %849 = vmatprep.subr.bf16.mxu0 0
        %850 = vmatpush1.bf16.msra.mxu0 0
        %851 = vmatprep.subr.bf16.mxu0 0
        %852 = vmatpush1.bf16.msra.mxu0 0
        %853 = vmatprep.subr.bf16.mxu0 0
        %854 = vmatpush1.bf16.msra.mxu0 0
        %855 = vmatprep.subr.bf16.mxu0 0
        %856 = vmatpush1.bf16.msra.mxu0 0
        %857 = vmatprep.subr.bf16.mxu0 0
        %858 = vmatpush1.bf16.msra.mxu0 0
        %859 = vmatprep.subr.bf16.mxu0 0
        %860 = vmatpush1.bf16.msra.mxu0 0
        %861 = vmatprep.subr.bf16.mxu0 0
        %862 = vmatpush1.bf16.msra.mxu0 0
        %863 = vmatprep.subr.bf16.mxu0 0
        %864 = vmatpush1.bf16.msra.mxu0 0
        %865 = vmatprep.subr.bf16.mxu0 0
        %866 = vmatpush1.bf16.msra.mxu0 0
        %867 = vmatprep.subr.bf16.mxu0 0
        %868 = vmatpush1.bf16.msra.mxu0 0
        %869 = vmatprep.subr.bf16.mxu0 0
        %870 = vmatpush1.bf16.msra.mxu0 0
        %871 = vmatprep.subr.bf16.mxu0 0
        %872 = vmatpush1.bf16.msra.mxu0 0
        %873 = vmatprep.mubr.bf16.mxu0 0
        %874 = vmatmul.mubr.bf16.gmra.mrb[0].mxu0 %v839
        %v875 = vpop.f32.mrb[0].mxu0
        %v876 = vadd.f32 %v270, %v875
        %v877 = vpop.f32.mrb[0].mxu0
        %v878 = vpop.f32.mrb[0].mxu0
        %v879 = vpop.f32.mrb[0].mxu0
        %880 = vdwg.mxu0
        %881 = vst.msk [vmem:[%s268] sm:$0xff] %vm271, %v876
        %s882 = sand.u32 %s141, 1
        %s883 = scalar_lea.sflag [#allocation4], %s882
        %s884 = sand.u32 %s141, 1
        %s885 = smul.addr %s884, 8
        %s886 = scalar_lea.vmem [#allocation8], %s885
        // Predicated region
        $region53: #{tpu_custom_call.1} parent=39 // pred_check
          %p887 = pneg %p151
        $region54: #{tpu_custom_call.1} parent=39 // pred_check_branch
          %889 = sbr.rel (%p887) target = $region56
        $region55: #{tpu_custom_call.1} parent=39 // pred_region
          %s891 = ssub.s32 128, 128
          %892 = vsyncadd %s883, %s891
          %s893 = smul.addr %s23, 128
          %s894 = scalar_lea.hbm %s5, %s893
          %s896 = sshll.u32 %s886, 4
          %s897 = int_to_ptr.vmem [resolvable:$true] %s896
          %899 = dma.vmem_to_hbm [thread:$0]  %s897, 128, %s894, %s883
        $region56: #{tpu_custom_call.1} parent=39 // pred_fallthru
          _
      $region40: #{tpu_custom_call.1} parent=5 // pred_fallthru
        _
      %p900 = scmp.le.s32.totalorder 2, %s18
      // Predicated region
      $region57: #{tpu_custom_call.1} parent=5 // pred_check
        %p901 = pneg %p900
      $region58: #{tpu_custom_call.1} parent=5 // pred_check_branch
        %903 = sbr.rel (%p901) target = $region60
      $region59: #{tpu_custom_call.1} parent=5 // pred_region
        %s904 = ssub.s32 %s18, 2
        // Predicated region
        $region61: #{tpu_custom_call.1} parent=59 // pred_check
          %p905 = pneg %p157
        $region62: #{tpu_custom_call.1} parent=59 // pred_check_branch
          %907 = sbr.rel (%p905) target = $region64
        $region63: #{tpu_custom_call.1} parent=59 // pred_region
          %s908 = sand.u32 %s142, 1
          %s909 = scalar_lea.sflag [#allocation4], %s908
          %s910 = sand.u32 %s142, 1
          %s911 = smul.addr %s910, 8
          %s912 = scalar_lea.vmem [#allocation8], %s911
          %913 = dma.done %s909, 128
        $region64: #{tpu_custom_call.1} parent=59 // pred_fallthru
          _
      $region60: #{tpu_custom_call.1} parent=5 // pred_fallthru
        _
    $region6: #{tpu_custom_call.1} parent=1 // loop_footer
      %s22 = sadd.s32 1, %s18
    $region7: #{tpu_custom_call.1} parent=1 // loop_footer_branch
      %17 = sbr.rel target = $region3
    $region8: #{tpu_custom_call.1} parent=1 // loop_exit
      _
    %914 = vsyncpa [#allocation3], 1
    %s915 = scalar_lea.sflag [#allocation3], 1
    %916 = vsyncpa %s915, 1
    %917 = vsyncpa [#allocation6], 1
    %918 = vsyncpa [#allocation4], 1
    %s919 = scalar_lea.sflag [#allocation4], 1
    %920 = vsyncpa %s919, 1

</llo_original>
